<compile_context>
chip_gen: v7x
topology: tpu7x:2x2x1
jax: 0.10.0
libtpu: 0.0.40
codegen_flags: <defaults>
</compile_context>

<pallas_src>
import math

import jax
import jax.numpy as jnp
from jax import lax
from jax.experimental import pallas as pl
from jax.experimental.pallas import tpu as pltpu


def _round_up(x, m):
    return (x + m - 1) // m * m


# ---------------------------------------------------------------------------
# Kernel
# ---------------------------------------------------------------------------
def _lm_head_kernel(feat_ref, wdt_ref, bd_ref, g_ref, b_ref, wot_ref, bo_ref,
                    out_ref, h_ref):
    # feat:  [tn, E]  bf16
    # wdt:   [E, E]   bf16 (dense weight, pre-transposed to input-major)
    # bd/g/b:[1, E]   f32  (dense bias, LN gamma, LN beta)
    # wot:   [E, tv]  bf16 (output weight, pre-transposed)
    # bo:    [1, tv]  f32
    # out:   [tn, tv]
    # h_ref: [tn, E]  bf16 VMEM scratch, persists across the V grid axis.
    # NOTE: the V axis must stay "arbitrary"; making it parallel would break
    # this per-N-tile initialization on a second core.

    @pl.when(pl.program_id(1) == 0)
    def _():
        # dense: x @ W_d^T + b_d   (nn.Linear semantics; W_d pre-transposed)
        h = jnp.dot(feat_ref[...], wdt_ref[...],
                    preferred_element_type=jnp.float32) + bd_ref[...]

        # exact GELU (erf-based, matches fairseq / PyTorch F.gelu default)
        h = 0.5 * h * (1.0 + lax.erf(h * jnp.float32(1.0 / math.sqrt(2.0))))

        # LayerNorm over last dim, eps = 1e-5 (PyTorch default)
        mean = jnp.mean(h, axis=-1, keepdims=True)
        var = jnp.mean((h - mean) * (h - mean), axis=-1, keepdims=True)
        h = (h - mean) * lax.rsqrt(var + jnp.float32(1e-5))
        h = h * g_ref[...] + b_ref[...]

        h_ref[...] = h.astype(h_ref.dtype)

    # vocab projection for this V tile: h @ W_out_tile + b_out_tile
    logits = jnp.dot(h_ref[...], wot_ref[...],
                     preferred_element_type=jnp.float32) + bo_ref[...]
    out_ref[...] = logits.astype(out_ref.dtype)


# ---------------------------------------------------------------------------
# Generation-aware tile / VMEM budget
# ---------------------------------------------------------------------------
def _tpu_budget():
    cap = 64 * 1024 * 1024  # conservative fallback (v7x-sized)
    try:
        info = pltpu.get_tpu_info()
        cap = int(getattr(info, "vmem_capacity_bytes", cap))
    except Exception:
        pass
    if cap >= 100 * 1024 * 1024:      # v5e / v6e: 128 MiB physical VMEM
        tn_max, tv_max = 1024, 4096
    else:                             # v7x: 64 MiB physical VMEM (or unknown)
        tn_max, tv_max = 512, 2048
    vmem_limit = min(cap * 3 // 4, 96 * 1024 * 1024)
    return tn_max, tv_max, vmem_limit


def _pick_tv(v, tv_max):
    """Largest tv (multiple of 128, <= tv_max) dividing the 128-padded vocab,
    so no post-kernel slice copy is needed; falls back to padding to tv_max."""
    v128 = _round_up(v, 128)
    t = min(tv_max, v128)
    t = (t // 128) * 128
    best = 0
    while t >= 128:
        if v128 % t == 0:
            best = t
            break
        t -= 128
    if best >= 512 or best == v128:
        return best, v128
    # pathological vocab factorization: accept a small pad + slice instead of
    # hundreds of tiny grid steps.
    tv = min(tv_max, v128)
    return tv, _round_up(v, tv)


def _estimate_vmem(tn, tv, e, out_bytes):
    feat = 2 * tn * e * 2            # double-buffered bf16 features
    wdt = e * e * 2                  # single-buffered dense weight
    vecs = 4 * max(e, tv) * 4        # biases / LN params (small)
    wot = 2 * e * tv * 2             # double-buffered streamed out weight
    bo = 2 * tv * 4
    out = 2 * tn * tv * out_bytes    # double-buffered output tile
    h = tn * e * 2                   # persistent post-LN scratch
    return feat + wdt + vecs + wot + bo + out + h


# ---------------------------------------------------------------------------
# One-time weight preparation (kernel layout)
# ---------------------------------------------------------------------------
def prepare_params(params, *, tv=None):
    """Convert PyTorch-layout weights into kernel layout ONCE at init.

    Transposes + casts to bf16 and pads the [V, E] output weight / bias along
    V.  Doing this per forward call costs ~E*V*(4+2) bytes of HBM traffic
    (hundreds of MB for real vocabs) and is NOT CSE'd across jit calls.
    """
    e = params["w_dense"].shape[0]
    v = params["w_out"].shape[0]
    _, tv_max, _ = _tpu_budget()
    if tv is None:
        tv, v_pad = _pick_tv(v, tv_max)
    else:
        tv = max(128, (int(tv) // 128) * 128)
        v_pad = _round_up(v, tv)

    wo_t = params["w_out"].T.astype(jnp.bfloat16)               # [E, V]
    bo = params["b_out"].reshape(1, v).astype(jnp.float32)
    if v_pad != v:
        wo_t = jnp.pad(wo_t, ((0, 0), (0, v_pad - v)))
        bo = jnp.pad(bo, ((0, 0), (0, v_pad - v)))

    return {
        "e": e, "v": v, "v_pad": v_pad, "tv": tv,
        "wd_t": params["w_dense"].T.astype(jnp.bfloat16),        # [E, E]
        "bd": params["b_dense"].reshape(1, e).astype(jnp.float32),
        "g": params["ln_gamma"].reshape(1, e).astype(jnp.float32),
        "b": params["ln_beta"].reshape(1, e).astype(jnp.float32),
        "wo_t": wo_t,                                            # [E, V_pad]
        "bo": bo,                                                # [1, V_pad]
    }


# ---------------------------------------------------------------------------
# Forward wrapper
# ---------------------------------------------------------------------------
def roberta_lm_head_cls(features, params, masked_tokens=None, *,
                        tn=None, out_dtype=jnp.bfloat16, return_padded=False):
    """features: [N, E] or [B, T, E].

    `params` is either the PyTorch-layout dict from init_params() (slow path,
    converted every call) or the kernel-layout dict from prepare_params()
    (fast path — use this in production).
    bf16 logits by default (halves the dominant N*V HBM writeback).
    """
    if "wo_t" not in params:
        params = prepare_params(params)

    e, v, v_pad, tv = params["e"], params["v"], params["v_pad"], params["tv"]
    features = features.reshape(-1, e)
    if masked_tokens is not None:
        # TODO(synk): fold this gather into the kernel via
        # PrefetchScalarGridSpec row indices to remove the HBM round trip of
        # the gathered [K, E] array; boolean masking here is eager-only
        # (data-dependent shape).
        features = features[jnp.asarray(masked_tokens).reshape(-1)]
    n = features.shape[0]

    tn_max, _, vmem_limit = _tpu_budget()
    out_bytes = jnp.dtype(out_dtype).itemsize

    # Cap tn by the VMEM budget (generation-aware), then balance the tail
    # tile so an awkward N does not waste most of the last tile.
    tn_cap = tn_max if tn is None else tn
    tn_cap = max(16, _round_up(int(tn_cap), 16))
    while (_estimate_vmem(tn_cap, tv, e, out_bytes) > int(vmem_limit * 0.9)
           and tn_cap > 16):
        tn_cap = max(16, _round_up(tn_cap // 2, 16))
    num_n_tiles = max(1, -(-n // tn_cap))
    tn_blk = min(tn_cap, _round_up(-(-n // num_n_tiles), 16))
    n_pad = _round_up(n, tn_blk)

    x = features.astype(jnp.bfloat16)
    if n_pad != n:
        x = jnp.pad(x, ((0, n_pad - n), (0, 0)))

    grid = (n_pad // tn_blk, v_pad // tv)

    def _in_specs(single_buffer_constants):
        # Constant-index inputs don't need a second pipeline buffer.
        ckw = ({"pipeline_mode": pl.Buffered(1)}
               if single_buffer_constants else {})
        return [
            pl.BlockSpec((tn_blk, e), lambda i, j: (i, 0)),        # features
            pl.BlockSpec((e, e), lambda i, j: (0, 0), **ckw),      # dense W^T
            pl.BlockSpec((1, e), lambda i, j: (0, 0), **ckw),      # dense bias
            pl.BlockSpec((1, e), lambda i, j: (0, 0), **ckw),      # LN gamma
            pl.BlockSpec((1, e), lambda i, j: (0, 0), **ckw),      # LN beta
            pl.BlockSpec((e, tv), lambda i, j: (0, j)),            # out W^T tile
            pl.BlockSpec((1, tv), lambda i, j: (0, j)),            # out bias tile
        ]

    def _run(single_buffer_constants):
        return pl.pallas_call(
            _lm_head_kernel,
            out_shape=jax.ShapeDtypeStruct((n_pad, v_pad), out_dtype),
            grid_spec=pltpu.PrefetchScalarGridSpec(
                num_scalar_prefetch=0,
                grid=grid,
                in_specs=_in_specs(single_buffer_constants),
                out_specs=pl.BlockSpec((tn_blk, tv), lambda i, j: (i, j)),
                scratch_shapes=[pltpu.VMEM((tn_blk, e), jnp.bfloat16)],
            ),
            compiler_params=pltpu.CompilerParams(
                dimension_semantics=("parallel", "arbitrary"),
                vmem_limit_bytes=int(vmem_limit),
            ),
        )(x, params["wd_t"], params["bd"], params["g"], params["b"],
          params["wo_t"], params["bo"])

    if hasattr(pl, "Buffered"):
        try:
            out = _run(True)
        except Exception:
            # pipeline_mode=Buffered(1) unsupported on this jax build; the
            # default double-buffered specs are semantically identical.
            out = _run(False)
    else:
        out = _run(False)

    if return_padded:
        # Padded vocab columns (>= v) are zero logits; mask them to -inf
        # before any downstream softmax / cross-entropy.
        return out if n_pad == n else out[:n]
    if n_pad == n and v_pad == v:
        return out
    return out[:n, :v]


# ---------------------------------------------------------------------------
# Parameters / reference
# ---------------------------------------------------------------------------
def init_params(key, embed_dim, output_dim):
    """PyTorch-layout parameters (nn.Linear weight = [out, in])."""
    k1, k2 = jax.random.split(key, 2)
    scale_d = 1.0 / math.sqrt(embed_dim)
    return {
        "w_dense": jax.random.uniform(k1, (embed_dim, embed_dim),
                                      jnp.float32, -scale_d, scale_d),
        "b_dense": jnp.zeros((embed_dim,), jnp.float32),
        "ln_gamma": jnp.ones((embed_dim,), jnp.float32),
        "ln_beta": jnp.zeros((embed_dim,), jnp.float32),
        "w_out": jax.random.uniform(k2, (output_dim, embed_dim),
                                    jnp.float32, -scale_d, scale_d),
        "b_out": jnp.zeros((output_dim,), jnp.float32),
    }


def _reference(features, params):
    """Pure-JAX reference with the same bf16-matmul / f32-accumulate numerics."""
    e = features.shape[-1]
    x = features.reshape(-1, e)
    h = jnp.dot(x.astype(jnp.bfloat16),
                params["w_dense"].T.astype(jnp.bfloat16),
                preferred_element_type=jnp.float32) + params["b_dense"][None, :]
    h = 0.5 * h * (1.0 + lax.erf(h / jnp.sqrt(jnp.float32(2.0))))
    mean = jnp.mean(h, axis=-1, keepdims=True)
    var = jnp.mean((h - mean) ** 2, axis=-1, keepdims=True)
    h = (h - mean) * lax.rsqrt(var + jnp.float32(1e-5))
    h = h * params["ln_gamma"][None, :] + params["ln_beta"][None, :]
    logits = jnp.dot(h.astype(jnp.bfloat16),
                     params["w_out"].T.astype(jnp.bfloat16),
                     preferred_element_type=jnp.float32) + params["b_out"][None, :]
    return logits


if __name__ == "__main__":
    key = jax.random.PRNGKey(0)
    k_feat, k_params = jax.random.split(key)

    batch, seq, embed_dim, output_dim = 2, 8, 128, 256
    features = jax.random.normal(k_feat, (batch, seq, embed_dim), jnp.float32)
    params = init_params(k_params, embed_dim, output_dim)
    prep = prepare_params(params)          # one-time kernel-layout weights

    ref_full = _reference(features, params)

    # 1) no masking, f32 logits (strict numerical check vs reference)
    out32 = roberta_lm_head_cls(features, prep, out_dtype=jnp.float32)
    out32 = jax.block_until_ready(out32)
    assert out32.shape == (batch * seq, output_dim)
    assert jnp.allclose(out32, ref_full, atol=2e-2, rtol=2e-2), (
        f"f32 mismatch vs reference: {float(jnp.max(jnp.abs(out32 - ref_full)))}")

    # 2) default bf16 logits (halved HBM writeback)
    out16 = roberta_lm_head_cls(features, prep)
    out16 = jax.block_until_ready(out16)
    assert out16.dtype == jnp.bfloat16
    assert jnp.allclose(out16.astype(jnp.float32), ref_full,
                        atol=5e-2, rtol=5e-2), "bf16 logits mismatch"

    # 3) raw PyTorch-layout params (slow, per-call conversion) must agree
    out_raw = roberta_lm_head_cls(features, params, out_dtype=jnp.float32)
    out_raw = jax.block_until_ready(out_raw)
    assert jnp.allclose(out_raw, out32, atol=1e-5, rtol=1e-5)

    # 4) masked_tokens path (ragged N -> padding + tail-balanced N tile)
    mask = (jnp.arange(batch * seq) % 3 != 1).reshape(batch, seq)   # 11 of 16
    out_m = roberta_lm_head_cls(features, prep, masked_tokens=mask,
                                out_dtype=jnp.float32)
    out_m = jax.block_until_ready(out_m)
    ref_m = ref_full[mask.reshape(-1)]
    assert out_m.shape == ref_m.shape
    assert jnp.allclose(out_m, ref_m, atol=2e-2, rtol=2e-2), (
        f"masked mismatch vs reference: {float(jnp.max(jnp.abs(out_m - ref_m)))}")

    print("KERNEL_OK")
</pallas_src>

<mosaic_0001>
module attributes {stable_mosaic.version = 11 : i64} {
  func.func @_lm_head_kernel(%arg0: i32, %arg1: i32, %arg2: memref<16x128xbf16, #tpu.memory_space<vmem>>, %arg3: memref<128x128xbf16, #tpu.memory_space<vmem>>, %arg4: memref<1x128xf32, #tpu.memory_space<vmem>>, %arg5: memref<1x128xf32, #tpu.memory_space<vmem>>, %arg6: memref<1x128xf32, #tpu.memory_space<vmem>>, %arg7: memref<128x256xbf16, #tpu.memory_space<vmem>>, %arg8: memref<1x256xf32, #tpu.memory_space<vmem>>, %arg9: memref<16x256xf32, #tpu.memory_space<vmem>>, %arg10: memref<16x128xbf16, #tpu.memory_space<vmem>>) attributes {dimension_semantics = [#tpu.dimension_semantics<parallel>, #tpu.dimension_semantics<arbitrary>], iteration_bounds = array<i64: 1, 1>, scalar_prefetch = 0 : i64, scratch_operands = 1 : i64, tpu.core_type = #tpu.core_type<tc>, window_params = [{transform_indices = @transform_0, window_bounds = array<i64: 16, 128>}, {pipeline_mode = #tpu.pipeline_mode<synchronous>, transform_indices = @transform_1, window_bounds = array<i64: 128, 128>}, {pipeline_mode = #tpu.pipeline_mode<synchronous>, transform_indices = @transform_2, window_bounds = array<i64: 1, 128>}, {pipeline_mode = #tpu.pipeline_mode<synchronous>, transform_indices = @transform_3, window_bounds = array<i64: 1, 128>}, {pipeline_mode = #tpu.pipeline_mode<synchronous>, transform_indices = @transform_4, window_bounds = array<i64: 1, 128>}, {transform_indices = @transform_5, window_bounds = array<i64: 128, 256>}, {transform_indices = @transform_6, window_bounds = array<i64: 1, 256>}, {transform_indices = @transform_7, window_bounds = array<i64: 16, 256>}]} {
    %c0_i32 = arith.constant 0 : i32
    %0 = arith.cmpi eq, %arg1, %c0_i32 : i32
    %1 = arith.extui %0 : i1 to i32
    %c0_i32_0 = arith.constant 0 : i32
    %2 = arith.cmpi ne, %1, %c0_i32_0 : i32
    scf.if %2 {
      %c0_8 = arith.constant 0 : index
      %c0_9 = arith.constant 0 : index
      %10 = vector.load %arg2[%c0_8, %c0_9] : memref<16x128xbf16, #tpu.memory_space<vmem>>, vector<16x128xbf16>
      %c0_10 = arith.constant 0 : index
      %c0_11 = arith.constant 0 : index
      %11 = vector.load %arg3[%c0_10, %c0_11] : memref<128x128xbf16, #tpu.memory_space<vmem>>, vector<128x128xbf16>
      %cst_12 = arith.constant dense<0.000000e+00> : vector<16x128xf32>
      %12 = tpu.matmul %10, %11, %cst_12 {dimension_numbers = #tpu.dot_dimension_numbers<[1], [0], [0], [1], [0, 0, 1, 1], [], []>} : vector<16x128xbf16>, vector<128x128xbf16>, vector<16x128xf32> -> vector<16x128xf32>
      %c0_13 = arith.constant 0 : index
      %c0_14 = arith.constant 0 : index
      %13 = vector.load %arg4[%c0_13, %c0_14] : memref<1x128xf32, #tpu.memory_space<vmem>>, vector<1x128xf32>
      %14 = vector.broadcast %13 : vector<1x128xf32> to vector<16x128xf32>
      %15 = arith.addf %12, %14 : vector<16x128xf32>
      %cst_15 = arith.constant 5.000000e-01 : f32
      %16 = vector.broadcast %cst_15 : f32 to vector<16x128xf32>
      %17 = arith.mulf %16, %15 : vector<16x128xf32>
      %cst_16 = arith.constant 0.707106769 : f32
      %18 = vector.broadcast %cst_16 : f32 to vector<16x128xf32>
      %19 = arith.mulf %15, %18 : vector<16x128xf32>
      %20 = math.erf %19 : vector<16x128xf32>
      %cst_17 = arith.constant 1.000000e+00 : f32
      %21 = vector.broadcast %cst_17 : f32 to vector<16x128xf32>
      %22 = arith.addf %21, %20 : vector<16x128xf32>
      %23 = arith.mulf %17, %22 : vector<16x128xf32>
      %cst_18 = arith.constant dense<0.000000e+00> : vector<16xf32>
      %24 = vector.multi_reduction <add>, %23, %cst_18 [1] : vector<16x128xf32> to vector<16xf32>
      %25 = vector.shape_cast %24 : vector<16xf32> to vector<16x1xf32>
      %cst_19 = arith.constant 1.280000e+02 : f32
      %26 = vector.broadcast %cst_19 : f32 to vector<16x1xf32>
      %27 = arith.divf %25, %26 : vector<16x1xf32>
      %28 = vector.broadcast %27 : vector<16x1xf32> to vector<16x128xf32>
      %29 = arith.subf %23, %28 : vector<16x128xf32>
      %30 = vector.broadcast %27 : vector<16x1xf32> to vector<16x128xf32>
      %31 = arith.subf %23, %30 : vector<16x128xf32>
      %32 = arith.mulf %29, %31 : vector<16x128xf32>
      %cst_20 = arith.constant dense<0.000000e+00> : vector<16xf32>
      %33 = vector.multi_reduction <add>, %32, %cst_20 [1] : vector<16x128xf32> to vector<16xf32>
      %34 = vector.shape_cast %33 : vector<16xf32> to vector<16x1xf32>
      %cst_21 = arith.constant 1.280000e+02 : f32
      %35 = vector.broadcast %cst_21 : f32 to vector<16x1xf32>
      %36 = arith.divf %34, %35 : vector<16x1xf32>
      %37 = vector.broadcast %27 : vector<16x1xf32> to vector<16x128xf32>
      %38 = arith.subf %23, %37 : vector<16x128xf32>
      %cst_22 = arith.constant 9.99999974E-6 : f32
      %39 = vector.broadcast %cst_22 : f32 to vector<16x1xf32>
      %40 = arith.addf %36, %39 : vector<16x1xf32>
      %41 = math.rsqrt %40 : vector<16x1xf32>
      %42 = vector.broadcast %41 : vector<16x1xf32> to vector<16x128xf32>
      %43 = arith.mulf %38, %42 : vector<16x128xf32>
      %c0_23 = arith.constant 0 : index
      %c0_24 = arith.constant 0 : index
      %44 = vector.load %arg5[%c0_23, %c0_24] : memref<1x128xf32, #tpu.memory_space<vmem>>, vector<1x128xf32>
      %45 = vector.broadcast %44 : vector<1x128xf32> to vector<16x128xf32>
      %46 = arith.mulf %43, %45 : vector<16x128xf32>
      %c0_25 = arith.constant 0 : index
      %c0_26 = arith.constant 0 : index
      %47 = vector.load %arg6[%c0_25, %c0_26] : memref<1x128xf32, #tpu.memory_space<vmem>>, vector<1x128xf32>
      %48 = vector.broadcast %47 : vector<1x128xf32> to vector<16x128xf32>
      %49 = arith.addf %46, %48 : vector<16x128xf32>
      %50 = arith.truncf %49 : vector<16x128xf32> to vector<16x128xbf16>
      %c0_27 = arith.constant 0 : index
      %c0_28 = arith.constant 0 : index
      %51 = vector.load %arg10[%c0_27, %c0_28] : memref<16x128xbf16, #tpu.memory_space<vmem>>, vector<16x128xbf16>
      tpu.vector_store %arg10[%c0_27, %c0_28], %50 {strides = array<i32>} : memref<16x128xbf16, #tpu.memory_space<vmem>>, vector<16x128xbf16>,
    } else {
    }
    %c0 = arith.constant 0 : index
    %c0_1 = arith.constant 0 : index
    %3 = vector.load %arg10[%c0, %c0_1] : memref<16x128xbf16, #tpu.memory_space<vmem>>, vector<16x128xbf16>
    %c0_2 = arith.constant 0 : index
    %c0_3 = arith.constant 0 : index
    %4 = vector.load %arg7[%c0_2, %c0_3] : memref<128x256xbf16, #tpu.memory_space<vmem>>, vector<128x256xbf16>
    %cst = arith.constant dense<0.000000e+00> : vector<16x256xf32>
    %5 = tpu.matmul %3, %4, %cst {dimension_numbers = #tpu.dot_dimension_numbers<[1], [0], [0], [1], [0, 0, 1, 1], [], []>} : vector<16x128xbf16>, vector<128x256xbf16>, vector<16x256xf32> -> vector<16x256xf32>
    %c0_4 = arith.constant 0 : index
    %c0_5 = arith.constant 0 : index
    %6 = vector.load %arg8[%c0_4, %c0_5] : memref<1x256xf32, #tpu.memory_space<vmem>>, vector<1x256xf32>
    %7 = vector.broadcast %6 : vector<1x256xf32> to vector<16x256xf32>
    %8 = arith.addf %5, %7 : vector<16x256xf32>
    %c0_6 = arith.constant 0 : index
    %c0_7 = arith.constant 0 : index
    %9 = vector.load %arg9[%c0_6, %c0_7] : memref<16x256xf32, #tpu.memory_space<vmem>>, vector<16x256xf32>
    tpu.vector_store %arg9[%c0_6, %c0_7], %8 {strides = array<i32>} : memref<16x256xf32, #tpu.memory_space<vmem>>, vector<16x256xf32>,
    return
  }
  func.func @transform_0(%arg0: i32, %arg1: i32) -> (i32, i32) {
    %c0_i32 = arith.constant 0 : i32
    %c0_i32_0 = arith.constant 0 : i32
    return %arg0, %c0_i32 : i32, i32
  }
  func.func @transform_1(%arg0: i32, %arg1: i32) -> (i32, i32) {
    %c0_i32 = arith.constant 0 : i32
    %c0_i32_0 = arith.constant 0 : i32
    %c0_i32_1 = arith.constant 0 : i32
    return %c0_i32, %c0_i32_0 : i32, i32
  }
  func.func @transform_2(%arg0: i32, %arg1: i32) -> (i32, i32) {
    %c0_i32 = arith.constant 0 : i32
    %c0_i32_0 = arith.constant 0 : i32
    %c0_i32_1 = arith.constant 0 : i32
    return %c0_i32, %c0_i32_0 : i32, i32
  }
  func.func @transform_3(%arg0: i32, %arg1: i32) -> (i32, i32) {
    %c0_i32 = arith.constant 0 : i32
    %c0_i32_0 = arith.constant 0 : i32
    %c0_i32_1 = arith.constant 0 : i32
    return %c0_i32, %c0_i32_0 : i32, i32
  }
  func.func @transform_4(%arg0: i32, %arg1: i32) -> (i32, i32) {
    %c0_i32 = arith.constant 0 : i32
    %c0_i32_0 = arith.constant 0 : i32
    %c0_i32_1 = arith.constant 0 : i32
    return %c0_i32, %c0_i32_0 : i32, i32
  }
  func.func @transform_5(%arg0: i32, %arg1: i32) -> (i32, i32) {
    %c0_i32 = arith.constant 0 : i32
    %c0_i32_0 = arith.constant 0 : i32
    return %c0_i32, %arg1 : i32, i32
  }
  func.func @transform_6(%arg0: i32, %arg1: i32) -> (i32, i32) {
    %c0_i32 = arith.constant 0 : i32
    %c0_i32_0 = arith.constant 0 : i32
    return %c0_i32, %arg1 : i32, i32
  }
  func.func @transform_7(%arg0: i32, %arg1: i32) -> (i32, i32) {
    %c0_i32 = arith.constant 0 : i32
    return %arg0, %arg1 : i32, i32
  }
}

module attributes {stable_mosaic.version = 11 : i64} {
  func.func @_lm_head_kernel(%arg0: i32, %arg1: i32, %arg2: memref<16x128xbf16, #tpu.memory_space<vmem>>, %arg3: memref<128x128xbf16, #tpu.memory_space<vmem>>, %arg4: memref<1x128xf32, #tpu.memory_space<vmem>>, %arg5: memref<1x128xf32, #tpu.memory_space<vmem>>, %arg6: memref<1x128xf32, #tpu.memory_space<vmem>>, %arg7: memref<128x256xbf16, #tpu.memory_space<vmem>>, %arg8: memref<1x256xf32, #tpu.memory_space<vmem>>, %arg9: memref<16x256xf32, #tpu.memory_space<vmem>>, %arg10: memref<16x128xbf16, #tpu.memory_space<vmem>>) attributes {dimension_semantics = [#tpu.dimension_semantics<parallel>, #tpu.dimension_semantics<arbitrary>], iteration_bounds = array<i64: 1, 1>, scalar_prefetch = 0 : i64, scratch_operands = 1 : i64, tpu.core_type = #tpu.core_type<tc>, window_params = [{transform_indices = @transform_0, window_bounds = array<i64: 16, 128>}, {pipeline_mode = #tpu.pipeline_mode<synchronous>, transform_indices = @transform_1, window_bounds = array<i64: 128, 128>}, {pipeline_mode = #tpu.pipeline_mode<synchronous>, transform_indices = @transform_2, window_bounds = array<i64: 1, 128>}, {pipeline_mode = #tpu.pipeline_mode<synchronous>, transform_indices = @transform_3, window_bounds = array<i64: 1, 128>}, {pipeline_mode = #tpu.pipeline_mode<synchronous>, transform_indices = @transform_4, window_bounds = array<i64: 1, 128>}, {transform_indices = @transform_5, window_bounds = array<i64: 128, 256>}, {transform_indices = @transform_6, window_bounds = array<i64: 1, 256>}, {transform_indices = @transform_7, window_bounds = array<i64: 16, 256>}]} {
    %c0_i32 = arith.constant 0 : i32
    %0 = arith.cmpi eq, %arg1, %c0_i32 : i32
    %1 = arith.extui %0 : i1 to i32
    %c0_i32_0 = arith.constant 0 : i32
    %2 = arith.cmpi ne, %1, %c0_i32_0 : i32
    scf.if %2 {
      %c0_8 = arith.constant 0 : index
      %c0_9 = arith.constant 0 : index
      %10 = vector.load %arg2[%c0_8, %c0_9] : memref<16x128xbf16, #tpu.memory_space<vmem>>, vector<16x128xbf16>
      %c0_10 = arith.constant 0 : index
      %c0_11 = arith.constant 0 : index
      %11 = vector.load %arg3[%c0_10, %c0_11] : memref<128x128xbf16, #tpu.memory_space<vmem>>, vector<128x128xbf16>
      %cst_12 = arith.constant dense<0.000000e+00> : vector<16x128xf32>
      %12 = tpu.matmul %10, %11, %cst_12 {dimension_numbers = #tpu.dot_dimension_numbers<[1], [0], [0], [1], [0, 0, 1, 1], [], []>} : vector<16x128xbf16>, vector<128x128xbf16>, vector<16x128xf32> -> vector<16x128xf32>
      %c0_13 = arith.constant 0 : index
      %c0_14 = arith.constant 0 : index
      %13 = vector.load %arg4[%c0_13, %c0_14] : memref<1x128xf32, #tpu.memory_space<vmem>>, vector<1x128xf32>
      %14 = vector.broadcast %13 : vector<1x128xf32> to vector<16x128xf32>
      %15 = arith.addf %12, %14 : vector<16x128xf32>
      %cst_15 = arith.constant 5.000000e-01 : f32
      %16 = vector.broadcast %cst_15 : f32 to vector<16x128xf32>
      %17 = arith.mulf %16, %15 : vector<16x128xf32>
      %cst_16 = arith.constant 0.707106769 : f32
      %18 = vector.broadcast %cst_16 : f32 to vector<16x128xf32>
      %19 = arith.mulf %15, %18 : vector<16x128xf32>
      %20 = math.erf %19 : vector<16x128xf32>
      %cst_17 = arith.constant 1.000000e+00 : f32
      %21 = vector.broadcast %cst_17 : f32 to vector<16x128xf32>
      %22 = arith.addf %21, %20 : vector<16x128xf32>
      %23 = arith.mulf %17, %22 : vector<16x128xf32>
      %cst_18 = arith.constant dense<0.000000e+00> : vector<16xf32>
      %24 = vector.multi_reduction <add>, %23, %cst_18 [1] : vector<16x128xf32> to vector<16xf32>
      %25 = vector.shape_cast %24 : vector<16xf32> to vector<16x1xf32>
      %cst_19 = arith.constant 1.280000e+02 : f32
      %26 = vector.broadcast %cst_19 : f32 to vector<16x1xf32>
      %27 = arith.divf %25, %26 : vector<16x1xf32>
      %28 = vector.broadcast %27 : vector<16x1xf32> to vector<16x128xf32>
      %29 = arith.subf %23, %28 : vector<16x128xf32>
      %30 = vector.broadcast %27 : vector<16x1xf32> to vector<16x128xf32>
      %31 = arith.subf %23, %30 : vector<16x128xf32>
      %32 = arith.mulf %29, %31 : vector<16x128xf32>
      %cst_20 = arith.constant dense<0.000000e+00> : vector<16xf32>
      %33 = vector.multi_reduction <add>, %32, %cst_20 [1] : vector<16x128xf32> to vector<16xf32>
      %34 = vector.shape_cast %33 : vector<16xf32> to vector<16x1xf32>
      %cst_21 = arith.constant 1.280000e+02 : f32
      %35 = vector.broadcast %cst_21 : f32 to vector<16x1xf32>
      %36 = arith.divf %34, %35 : vector<16x1xf32>
      %37 = vector.broadcast %27 : vector<16x1xf32> to vector<16x128xf32>
      %38 = arith.subf %23, %37 : vector<16x128xf32>
      %cst_22 = arith.constant 9.99999974E-6 : f32
      %39 = vector.broadcast %cst_22 : f32 to vector<16x1xf32>
      %40 = arith.addf %36, %39 : vector<16x1xf32>
      %41 = math.rsqrt %40 : vector<16x1xf32>
      %42 = vector.broadcast %41 : vector<16x1xf32> to vector<16x128xf32>
      %43 = arith.mulf %38, %42 : vector<16x128xf32>
      %c0_23 = arith.constant 0 : index
      %c0_24 = arith.constant 0 : index
      %44 = vector.load %arg5[%c0_23, %c0_24] : memref<1x128xf32, #tpu.memory_space<vmem>>, vector<1x128xf32>
      %45 = vector.broadcast %44 : vector<1x128xf32> to vector<16x128xf32>
      %46 = arith.mulf %43, %45 : vector<16x128xf32>
      %c0_25 = arith.constant 0 : index
      %c0_26 = arith.constant 0 : index
      %47 = vector.load %arg6[%c0_25, %c0_26] : memref<1x128xf32, #tpu.memory_space<vmem>>, vector<1x128xf32>
      %48 = vector.broadcast %47 : vector<1x128xf32> to vector<16x128xf32>
      %49 = arith.addf %46, %48 : vector<16x128xf32>
      %50 = arith.truncf %49 : vector<16x128xf32> to vector<16x128xbf16>
      %c0_27 = arith.constant 0 : index
      %c0_28 = arith.constant 0 : index
      %51 = vector.load %arg10[%c0_27, %c0_28] : memref<16x128xbf16, #tpu.memory_space<vmem>>, vector<16x128xbf16>
      tpu.vector_store %arg10[%c0_27, %c0_28], %50 {strides = array<i32>} : memref<16x128xbf16, #tpu.memory_space<vmem>>, vector<16x128xbf16>,
    } else {
    }
    %c0 = arith.constant 0 : index
    %c0_1 = arith.constant 0 : index
    %3 = vector.load %arg10[%c0, %c0_1] : memref<16x128xbf16, #tpu.memory_space<vmem>>, vector<16x128xbf16>
    %c0_2 = arith.constant 0 : index
    %c0_3 = arith.constant 0 : index
    %4 = vector.load %arg7[%c0_2, %c0_3] : memref<128x256xbf16, #tpu.memory_space<vmem>>, vector<128x256xbf16>
    %cst = arith.constant dense<0.000000e+00> : vector<16x256xf32>
    %5 = tpu.matmul %3, %4, %cst {dimension_numbers = #tpu.dot_dimension_numbers<[1], [0], [0], [1], [0, 0, 1, 1], [], []>} : vector<16x128xbf16>, vector<128x256xbf16>, vector<16x256xf32> -> vector<16x256xf32>
    %c0_4 = arith.constant 0 : index
    %c0_5 = arith.constant 0 : index
    %6 = vector.load %arg8[%c0_4, %c0_5] : memref<1x256xf32, #tpu.memory_space<vmem>>, vector<1x256xf32>
    %7 = vector.broadcast %6 : vector<1x256xf32> to vector<16x256xf32>
    %8 = arith.addf %5, %7 : vector<16x256xf32>
    %c0_6 = arith.constant 0 : index
    %c0_7 = arith.constant 0 : index
    %9 = vector.load %arg9[%c0_6, %c0_7] : memref<16x256xf32, #tpu.memory_space<vmem>>, vector<16x256xf32>
    tpu.vector_store %arg9[%c0_6, %c0_7], %8 {strides = array<i32>} : memref<16x256xf32, #tpu.memory_space<vmem>>, vector<16x256xf32>,
    return
  }
  func.func @transform_0(%arg0: i32, %arg1: i32) -> (i32, i32) {
    %c0_i32 = arith.constant 0 : i32
    %c0_i32_0 = arith.constant 0 : i32
    return %arg0, %c0_i32 : i32, i32
  }
  func.func @transform_1(%arg0: i32, %arg1: i32) -> (i32, i32) {
    %c0_i32 = arith.constant 0 : i32
    %c0_i32_0 = arith.constant 0 : i32
    %c0_i32_1 = arith.constant 0 : i32
    return %c0_i32, %c0_i32_0 : i32, i32
  }
  func.func @transform_2(%arg0: i32, %arg1: i32) -> (i32, i32) {
    %c0_i32 = arith.constant 0 : i32
    %c0_i32_0 = arith.constant 0 : i32
    %c0_i32_1 = arith.constant 0 : i32
    return %c0_i32, %c0_i32_0 : i32, i32
  }
  func.func @transform_3(%arg0: i32, %arg1: i32) -> (i32, i32) {
    %c0_i32 = arith.constant 0 : i32
    %c0_i32_0 = arith.constant 0 : i32
    %c0_i32_1 = arith.constant 0 : i32
    return %c0_i32, %c0_i32_0 : i32, i32
  }
  func.func @transform_4(%arg0: i32, %arg1: i32) -> (i32, i32) {
    %c0_i32 = arith.constant 0 : i32
    %c0_i32_0 = arith.constant 0 : i32
    %c0_i32_1 = arith.constant 0 : i32
    return %c0_i32, %c0_i32_0 : i32, i32
  }
  func.func @transform_5(%arg0: i32, %arg1: i32) -> (i32, i32) {
    %c0_i32 = arith.constant 0 : i32
    %c0_i32_0 = arith.constant 0 : i32
    return %c0_i32, %arg1 : i32, i32
  }
  func.func @transform_6(%arg0: i32, %arg1: i32) -> (i32, i32) {
    %c0_i32 = arith.constant 0 : i32
    %c0_i32_0 = arith.constant 0 : i32
    return %c0_i32, %arg1 : i32, i32
  }
  func.func @transform_7(%arg0: i32, %arg1: i32) -> (i32, i32) {
    %c0_i32 = arith.constant 0 : i32
    return %arg0, %arg1 : i32, i32
  }
}

</mosaic_0001>

<llo_original>
// kernel: tpu_custom_call.1
$region0: #{tpu_custom_call.1}
  #allocation0 [shape = 'u32[]', space=smem, size = 0x4, offset = 0x4, fixed_abs, tag = 'smem constant byte address 0x4 - core index']
  #allocation1 [shape = 'u32[144,128]{1,0:T(1,128)}', space=vmem, size = 0x12000, scoped, tag = 'internal scratch']
  #allocation2 [shape = 'bf16[16,128]{1,0:T(16,128)(2,1)}', space=vmem, size = 0x1000, scoped, tag = 'scratch operand']
  %s0 = inlined_call_operand.hbm [shape: bf16[16,128], index: 0, kind: input, shape index: {}]
  %s1 = inlined_call_operand.hbm [shape: bf16[128,128], index: 1, kind: input, shape index: {}]
  %s2 = inlined_call_operand.vmem [shape: f32[1,128], index: 2, kind: input, shape index: {}]
  %s3 = inlined_call_operand.vmem [shape: f32[1,128], index: 3, kind: input, shape index: {}]
  %s4 = inlined_call_operand.vmem [shape: f32[1,128], index: 4, kind: input, shape index: {}]
  %s5 = inlined_call_operand.hbm [shape: bf16[128,256], index: 5, kind: input, shape index: {}]
  %s6 = inlined_call_operand.vmem [shape: f32[1,256], index: 6, kind: input, shape index: {}]
  %s7 = inlined_call_operand.hbm [shape: f32[16,256], index: 7, kind: output, shape index: {}]
  %s8 = sld [smem:[#allocation0]]
  $region54: #{tpu_custom_call.1} parent=0
    _
  %s10 = ssub.s32 1, %s8
  %s11 = scalar_select 0, %s10, %s8
  $region1: #{tpu_custom_call.1} parent=0
    #allocation3 [shape = 'u8[4096]{0}', space=vmem, size = 0x1000, scoped, tag = 'input window, operand 0, single buffered']
    #allocation4 [shape = 's32[1]{0}', space=sflag, size = 0x4, scoped, tag = 'scoped memory for tpu_custom_call.1']
    #allocation5 [shape = 's32[1]{0}', space=sflag, size = 0x4, scoped, tag = 'scoped memory for tpu_custom_call.1']
    #allocation6 [shape = 'u8[32768]{0}', space=vmem, size = 0x8000, scoped, tag = 'input window, operand 1, single buffered']
    #allocation7 [shape = 's32[1]{0}', space=sflag, size = 0x4, scoped, tag = 'scoped memory for tpu_custom_call.1']
    #allocation8 [shape = 'u8[65536]{0}', space=vmem, size = 0x10000, scoped, tag = 'input window, operand 5, single buffered']
    #allocation9 [shape = 'u8[16384]{0}', space=vmem, size = 0x4000, scoped, tag = 'output window, operand 0, single buffered']
    %12 = vsyncpa [#allocation4], 0
    %13 = vsyncpa [#allocation7], 0
    %14 = vsyncpa [#allocation5], 0
    // Predicated region
    $region2: #{tpu_custom_call.1} parent=1 // pred_check
      _
    $region3: #{tpu_custom_call.1} parent=1 // pred_check_branch
      %16 = sbr.rel (0) target = $region5
    $region4: #{tpu_custom_call.1} parent=1 // pred_region
      %s18 = ssub.s32 128, 128
      %19 = vsyncadd [#allocation4], %s18
      %s20 = sshll.u32 [#allocation3], 4
      %s21 = int_to_ptr.vmem [resolvable:$true] %s20
      %26 = dma.hbm_to_vmem [thread:$0]  %s0, 128, %s21, [#allocation4], 64, 64, 4
    $region5: #{tpu_custom_call.1} parent=1 // pred_fallthru
      _
    // Predicated region
    $region6: #{tpu_custom_call.1} parent=1 // pred_check
      _
    $region7: #{tpu_custom_call.1} parent=1 // pred_check_branch
      %28 = sbr.rel (0) target = $region9
    $region8: #{tpu_custom_call.1} parent=1 // pred_region
      %s30 = ssub.s32 1024, 1024
      %31 = vsyncadd [#allocation7], %s30
      %s32 = sshll.u32 [#allocation6], 4
      %s33 = int_to_ptr.vmem [resolvable:$true] %s32
      %38 = dma.hbm_to_vmem [thread:$0]  %s1, 1024, %s33, [#allocation7], 64, 64, 4
    $region9: #{tpu_custom_call.1} parent=1 // pred_fallthru
      _
    // Predicated region
    $region10: #{tpu_custom_call.1} parent=1 // pred_check
      _
    $region11: #{tpu_custom_call.1} parent=1 // pred_check_branch
      %40 = sbr.rel (0) target = $region13
    $region12: #{tpu_custom_call.1} parent=1 // pred_region
      _
    $region13: #{tpu_custom_call.1} parent=1 // pred_fallthru
      _
    // Predicated region
    $region14: #{tpu_custom_call.1} parent=1 // pred_check
      _
    $region15: #{tpu_custom_call.1} parent=1 // pred_check_branch
      %42 = sbr.rel (0) target = $region17
    $region16: #{tpu_custom_call.1} parent=1 // pred_region
      _
    $region17: #{tpu_custom_call.1} parent=1 // pred_fallthru
      _
    // Predicated region
    $region18: #{tpu_custom_call.1} parent=1 // pred_check
      _
    $region19: #{tpu_custom_call.1} parent=1 // pred_check_branch
      %44 = sbr.rel (0) target = $region21
    $region20: #{tpu_custom_call.1} parent=1 // pred_region
      _
    $region21: #{tpu_custom_call.1} parent=1 // pred_fallthru
      _
    // Predicated region
    $region22: #{tpu_custom_call.1} parent=1 // pred_check
      _
    $region23: #{tpu_custom_call.1} parent=1 // pred_check_branch
      %46 = sbr.rel (0) target = $region25
    $region24: #{tpu_custom_call.1} parent=1 // pred_region
      %s48 = ssub.s32 2048, 2048
      %49 = vsyncadd [#allocation7], %s48
      %s50 = sshll.u32 [#allocation8], 4
      %s51 = int_to_ptr.vmem [resolvable:$true] %s50
      %56 = dma.hbm_to_vmem [thread:$0]  %s5, 2048, %s51, [#allocation7], 128, 128, 8
    $region25: #{tpu_custom_call.1} parent=1 // pred_fallthru
      _
    // Predicated region
    $region26: #{tpu_custom_call.1} parent=1 // pred_check
      _
    $region27: #{tpu_custom_call.1} parent=1 // pred_check_branch
      %58 = sbr.rel (0) target = $region29
    $region28: #{tpu_custom_call.1} parent=1 // pred_region
      _
    $region29: #{tpu_custom_call.1} parent=1 // pred_fallthru
      _
    // Predicated region
    $region30: #{tpu_custom_call.1} parent=1 // pred_check
      _
    $region31: #{tpu_custom_call.1} parent=1 // pred_check_branch
      %60 = sbr.rel (0) target = $region33
    $region32: #{tpu_custom_call.1} parent=1 // pred_region
      %61 = dma.done [#allocation4], 128
    $region33: #{tpu_custom_call.1} parent=1 // pred_fallthru
      _
    // Predicated region
    $region34: #{tpu_custom_call.1} parent=1 // pred_check
      _
    $region35: #{tpu_custom_call.1} parent=1 // pred_check_branch
      %63 = sbr.rel (0) target = $region37
    $region36: #{tpu_custom_call.1} parent=1 // pred_region
      %64 = dma.done [#allocation7], 1024
    $region37: #{tpu_custom_call.1} parent=1 // pred_fallthru
      _
    // Predicated region
    $region38: #{tpu_custom_call.1} parent=1 // pred_check
      _
    $region39: #{tpu_custom_call.1} parent=1 // pred_check_branch
      %66 = sbr.rel (0) target = $region41
    $region40: #{tpu_custom_call.1} parent=1 // pred_region
      %67 = dma.done [#allocation7], 2048
    $region41: #{tpu_custom_call.1} parent=1 // pred_fallthru
      _
    %p69 = scmp.eq.s32.totalorder 0, 0
    // Predicated region
    $region42: #{tpu_custom_call.1} parent=1 // pred_check
      %p70 = pneg %p69
    $region43: #{tpu_custom_call.1} parent=1 // pred_check_branch
      %72 = sbr.rel (%p70) target = $region45
    $region44: #{tpu_custom_call.1} parent=1 // pred_region
      %v73 = vld [vmem:[#allocation3] sm:$0xf]
      %v74 = vld [vmem:[#allocation3 + $0x4] sm:$0xf]
      %v75 = vld [vmem:[#allocation6] sm:$0xf]
      %v76 = vld [vmem:[#allocation6 + $0x4] sm:$0xf]
      %v77 = vld [vmem:[#allocation6 + $0x8] sm:$0xf]
      %v78 = vld [vmem:[#allocation6 + $0xc] sm:$0xf]
      %v79 = vld [vmem:[#allocation6 + $0x10] sm:$0xf]
      %v80 = vld [vmem:[#allocation6 + $0x14] sm:$0xf]
      %v81 = vld [vmem:[#allocation6 + $0x18] sm:$0xf]
      %v82 = vld [vmem:[#allocation6 + $0x1c] sm:$0xf]
      %v83 = vld [vmem:[#allocation6 + $0x20] sm:$0xf]
      %v84 = vld [vmem:[#allocation6 + $0x24] sm:$0xf]
      %v85 = vld [vmem:[#allocation6 + $0x28] sm:$0xf]
      %v86 = vld [vmem:[#allocation6 + $0x2c] sm:$0xf]
      %v87 = vld [vmem:[#allocation6 + $0x30] sm:$0xf]
      %v88 = vld [vmem:[#allocation6 + $0x34] sm:$0xf]
      %v89 = vld [vmem:[#allocation6 + $0x38] sm:$0xf]
      %v90 = vld [vmem:[#allocation6 + $0x3c] sm:$0xf]
      %v91 = vld [vmem:[%s2] sm:$0x1]
      %v93 = vlaneseq
      %v94 = vshrl.u32 %v93, 7
      %v95 = vsub.s32 0, %v94
      %v96 = vrot.slane %v91, %v95
      %v100 = vunpack.c.l.b16 %v73
      %v101 = vunpack.c.l.b16 %v74
      %v102 = vpack.c.b16 %v101, %v100
      %v120 = vunpack.c.l.b16 %v75
      %v121 = vunpack.c.l.b16 %v76
      %v122 = vunpack.c.l.b16 %v77
      %v123 = vunpack.c.l.b16 %v78
      %v124 = vunpack.c.l.b16 %v79
      %v125 = vunpack.c.l.b16 %v80
      %v126 = vunpack.c.l.b16 %v81
      %v127 = vunpack.c.l.b16 %v82
      %v128 = vunpack.c.l.b16 %v83
      %v129 = vunpack.c.l.b16 %v84
      %v130 = vunpack.c.l.b16 %v85
      %v131 = vunpack.c.l.b16 %v86
      %v132 = vunpack.c.l.b16 %v87
      %v133 = vunpack.c.l.b16 %v88
      %v134 = vunpack.c.l.b16 %v89
      %v135 = vunpack.c.l.b16 %v90
      %v136 = vpack.c.b16 %v121, %v120
      %v137 = vpack.c.b16 %v123, %v122
      %v138 = vpack.c.b16 %v125, %v124
      %v139 = vpack.c.b16 %v127, %v126
      %v140 = vpack.c.b16 %v129, %v128
      %v141 = vpack.c.b16 %v131, %v130
      %v142 = vpack.c.b16 %v133, %v132
      %v143 = vpack.c.b16 %v135, %v134
      %152 = vmatprep.subr.bf16.mxu0 0
      %153 = vmatpush1.bf16.msra.mxu0 %v136
      %154 = vmatprep.subr.bf16.mxu0 0
      %155 = vmatpush1.bf16.msra.mxu0 %v137
      %156 = vmatprep.subr.bf16.mxu0 0
      %157 = vmatpush1.bf16.msra.mxu0 %v138
      %158 = vmatprep.subr.bf16.mxu0 0
      %159 = vmatpush1.bf16.msra.mxu0 %v139
      %160 = vmatprep.subr.bf16.mxu0 0
      %161 = vmatpush1.bf16.msra.mxu0 %v140
      %162 = vmatprep.subr.bf16.mxu0 0
      %163 = vmatpush1.bf16.msra.mxu0 %v141
      %164 = vmatprep.subr.bf16.mxu0 0
      %165 = vmatpush1.bf16.msra.mxu0 %v142
      %166 = vmatprep.subr.bf16.mxu0 0
      %167 = vmatpush1.bf16.msra.mxu0 %v143
      %168 = vmatprep.subr.bf16.mxu0 0
      %169 = vmatpush1.bf16.msra.mxu0 0
      %170 = vmatprep.subr.bf16.mxu0 0
      %171 = vmatpush1.bf16.msra.mxu0 0
      %172 = vmatprep.subr.bf16.mxu0 0
      %173 = vmatpush1.bf16.msra.mxu0 0
      %174 = vmatprep.subr.bf16.mxu0 0
      %175 = vmatpush1.bf16.msra.mxu0 0
      %176 = vmatprep.subr.bf16.mxu0 0
      %177 = vmatpush1.bf16.msra.mxu0 0
      %178 = vmatprep.subr.bf16.mxu0 0
      %179 = vmatpush1.bf16.msra.mxu0 0
      %180 = vmatprep.subr.bf16.mxu0 0
      %181 = vmatpush1.bf16.msra.mxu0 0
      %182 = vmatprep.subr.bf16.mxu0 0
      %183 = vmatpush1.bf16.msra.mxu0 0
      %184 = vmatprep.mubr.bf16.mxu0 0
      %185 = vmatmul.mubr.bf16.gmra.mrb[0].mxu0 %v102
      %v186 = vpop.f32.mrb[0].mxu0
      %v187 = vadd.f32 %v96, %v186
      %v188 = vpop.f32.mrb[0].mxu0
      %v189 = vpop.f32.mrb[0].mxu0
      %v190 = vadd.f32 %v96, %v189
      %v191 = vpop.f32.mrb[0].mxu0
      %192 = vdwg.mxu0
      %v193 = vmul.f32 %v187, 0.5
      %v194 = vmul.f32 %v190, 0.5
      %v195 = vmul.f32 %v187, 0.70710677
      %v196 = vmul.f32 %v190, 0.70710677
      %v197 = verf.f32.pop %v195
      %v198 = verf.f32.pop %v196
      %v199 = vadd.f32 %v197, 1.0
      %v200 = vadd.f32 %v198, 1.0
      %v201 = vmul.f32 %v193, %v199
      %v202 = vmul.f32 %v194, %v200
      %203 = vadd.xlane.f32.xlu0 %v201
      %v204 = vpop.xlane.xlu0 %203
      %205 = vadd.xlane.f32.xlu0 %v202
      %v206 = vpop.xlane.xlu0 %205
      %v207 = vrcp.pop 128.0
      %v208 = vmul.f32 %v204, %v207
      %v209 = vmul.f32 %v206, %v207
      %v210 = vsub.f32 %v201, %v208
      %v211 = vsub.f32 %v202, %v209
      %v212 = vmul.f32 %v210, %v210
      %v213 = vmul.f32 %v211, %v211
      %214 = vadd.xlane.f32.xlu0 %v212
      %v215 = vpop.xlane.xlu0 %214
      %216 = vadd.xlane.f32.xlu0 %v213
      %v217 = vpop.xlane.xlu0 %216
      %v218 = vmul.f32 %v215, %v207
      %v219 = vmul.f32 %v217, %v207
      %v220 = vadd.f32 %v218, 1e-05
      %v221 = vadd.f32 %v219, 1e-05
      %v222 = vrsqrt.pop %v220
      %v223 = vrsqrt.pop %v221
      %v224 = vmul.f32 %v210, %v222
      %v225 = vmul.f32 %v211, %v223
      %v226 = vld [vmem:[%s3] sm:$0x1]
      %v228 = vlaneseq
      %v229 = vshrl.u32 %v228, 7
      %v230 = vsub.s32 0, %v229
      %v231 = vrot.slane %v226, %v230
      %v233 = vmul.f32 %v224, %v231
      %v234 = vmul.f32 %v225, %v231
      %v235 = vld [vmem:[%s4] sm:$0x1]
      %v237 = vlaneseq
      %v238 = vshrl.u32 %v237, 7
      %v239 = vsub.s32 0, %v238
      %v240 = vrot.slane %v235, %v239
      %v242 = vadd.f32 %v233, %v240
      %v243 = vadd.f32 %v234, %v240
      %v244 = vpack.c.bf16 %v243, %v242
      %245 = vst [vmem:[#allocation2] sm:$0xff] %v244
    $region45: #{tpu_custom_call.1} parent=1 // pred_fallthru
      _
    %v246 = vld [vmem:[#allocation2] sm:$0xff]
    %v247 = vld [vmem:[#allocation8] sm:$0xff]
    %v248 = vld [vmem:[#allocation8 + $0x8] sm:$0xff]
    %v249 = vld [vmem:[#allocation8 + $0x10] sm:$0xff]
    %v250 = vld [vmem:[#allocation8 + $0x18] sm:$0xff]
    %v251 = vld [vmem:[#allocation8 + $0x20] sm:$0xff]
    %v252 = vld [vmem:[#allocation8 + $0x28] sm:$0xff]
    %v253 = vld [vmem:[#allocation8 + $0x30] sm:$0xff]
    %v254 = vld [vmem:[#allocation8 + $0x38] sm:$0xff]
    %v255 = vld [vmem:[#allocation8 + $0x40] sm:$0xff]
    %v256 = vld [vmem:[#allocation8 + $0x48] sm:$0xff]
    %v257 = vld [vmem:[#allocation8 + $0x50] sm:$0xff]
    %v258 = vld [vmem:[#allocation8 + $0x58] sm:$0xff]
    %v259 = vld [vmem:[#allocation8 + $0x60] sm:$0xff]
    %v260 = vld [vmem:[#allocation8 + $0x68] sm:$0xff]
    %v261 = vld [vmem:[#allocation8 + $0x70] sm:$0xff]
    %v262 = vld [vmem:[#allocation8 + $0x78] sm:$0xff]
    %v263 = vld [vmem:[%s6] sm:$0x3]
    %v265 = vlaneseq
    %v266 = vshrl.u32 %v265, 7
    %v267 = vsub.s32 0, %v266
    %v268 = vrot.slane %v263, %v267
    %v269 = vlaneseq
    %v270 = vshrl.u32 %v269, 7
    %v271 = vsub.s32 1, %v270
    %v272 = vrot.slane %v263, %v271
    %v291 = vunpack.c.l.b16 %v247
    %v292 = vunpack.c.h.b16 %v247
    %v293 = vunpack.c.l.b16 %v248
    %v294 = vunpack.c.h.b16 %v248
    %v295 = vunpack.c.l.b16 %v249
    %v296 = vunpack.c.h.b16 %v249
    %v297 = vunpack.c.l.b16 %v250
    %v298 = vunpack.c.h.b16 %v250
    %v299 = vunpack.c.l.b16 %v251
    %v300 = vunpack.c.h.b16 %v251
    %v301 = vunpack.c.l.b16 %v252
    %v302 = vunpack.c.h.b16 %v252
    %v303 = vunpack.c.l.b16 %v253
    %v304 = vunpack.c.h.b16 %v253
    %v305 = vunpack.c.l.b16 %v254
    %v306 = vunpack.c.h.b16 %v254
    %v307 = vunpack.c.l.b16 %v255
    %v308 = vunpack.c.h.b16 %v255
    %v309 = vunpack.c.l.b16 %v256
    %v310 = vunpack.c.h.b16 %v256
    %v311 = vunpack.c.l.b16 %v257
    %v312 = vunpack.c.h.b16 %v257
    %v313 = vunpack.c.l.b16 %v258
    %v314 = vunpack.c.h.b16 %v258
    %v315 = vunpack.c.l.b16 %v259
    %v316 = vunpack.c.h.b16 %v259
    %v317 = vunpack.c.l.b16 %v260
    %v318 = vunpack.c.h.b16 %v260
    %v319 = vunpack.c.l.b16 %v261
    %v320 = vunpack.c.h.b16 %v261
    %v321 = vunpack.c.l.b16 %v262
    %v322 = vunpack.c.h.b16 %v262
    %v323 = vpack.c.b16 %v293, %v291
    %v324 = vpack.c.b16 %v294, %v292
    %v325 = vpack.c.b16 %v297, %v295
    %v326 = vpack.c.b16 %v298, %v296
    %v327 = vpack.c.b16 %v301, %v299
    %v328 = vpack.c.b16 %v302, %v300
    %v329 = vpack.c.b16 %v305, %v303
    %v330 = vpack.c.b16 %v306, %v304
    %v331 = vpack.c.b16 %v309, %v307
    %v332 = vpack.c.b16 %v310, %v308
    %v333 = vpack.c.b16 %v313, %v311
    %v334 = vpack.c.b16 %v314, %v312
    %v335 = vpack.c.b16 %v317, %v315
    %v336 = vpack.c.b16 %v318, %v316
    %v337 = vpack.c.b16 %v321, %v319
    %v338 = vpack.c.b16 %v322, %v320
    %355 = vmatprep.subr.bf16.mxu0 %v324
    %356 = vmatpush1.bf16.msra.mxu0 %v323
    %357 = vmatprep.subr.bf16.mxu0 %v326
    %358 = vmatpush1.bf16.msra.mxu0 %v325
    %359 = vmatprep.subr.bf16.mxu0 %v328
    %360 = vmatpush1.bf16.msra.mxu0 %v327
    %361 = vmatprep.subr.bf16.mxu0 %v330
    %362 = vmatpush1.bf16.msra.mxu0 %v329
    %363 = vmatprep.subr.bf16.mxu0 %v332
    %364 = vmatpush1.bf16.msra.mxu0 %v331
    %365 = vmatprep.subr.bf16.mxu0 %v334
    %366 = vmatpush1.bf16.msra.mxu0 %v333
    %367 = vmatprep.subr.bf16.mxu0 %v336
    %368 = vmatpush1.bf16.msra.mxu0 %v335
    %369 = vmatprep.subr.bf16.mxu0 %v338
    %370 = vmatpush1.bf16.msra.mxu0 %v337
    %371 = vmatprep.subr.bf16.mxu0 0
    %372 = vmatpush1.bf16.msra.mxu0 0
    %373 = vmatprep.subr.bf16.mxu0 0
    %374 = vmatpush1.bf16.msra.mxu0 0
    %375 = vmatprep.subr.bf16.mxu0 0
    %376 = vmatpush1.bf16.msra.mxu0 0
    %377 = vmatprep.subr.bf16.mxu0 0
    %378 = vmatpush1.bf16.msra.mxu0 0
    %379 = vmatprep.subr.bf16.mxu0 0
    %380 = vmatpush1.bf16.msra.mxu0 0
    %381 = vmatprep.subr.bf16.mxu0 0
    %382 = vmatpush1.bf16.msra.mxu0 0
    %383 = vmatprep.subr.bf16.mxu0 0
    %384 = vmatpush1.bf16.msra.mxu0 0
    %385 = vmatprep.subr.bf16.mxu0 0
    %386 = vmatpush1.bf16.msra.mxu0 0
    %387 = vmatprep.mubr.bf16.mxu0 0
    %388 = vmatmul.mubr.bf16.gmra.mrb[0].mxu0 %v246
    %v389 = vpop.f32.mrb[0].mxu0
    %v390 = vadd.f32 %v268, %v389
    %v391 = vpop.f32.mrb[0].mxu0
    %v392 = vadd.f32 %v272, %v391
    %v393 = vpop.f32.mrb[0].mxu0
    %v394 = vadd.f32 %v268, %v393
    %v395 = vpop.f32.mrb[0].mxu0
    %v396 = vadd.f32 %v272, %v395
    %397 = vdwg.mxu0
    %398 = vst [vmem:[#allocation9] sm:$0xff] %v390
    %399 = vst [vmem:[#allocation9 + $0x8] sm:$0xff] %v392
    %400 = vst [vmem:[#allocation9 + $0x10] sm:$0xff] %v394
    %401 = vst [vmem:[#allocation9 + $0x18] sm:$0xff] %v396
    // Predicated region
    $region46: #{tpu_custom_call.1} parent=1 // pred_check
      _
    $region47: #{tpu_custom_call.1} parent=1 // pred_check_branch
      %403 = sbr.rel (0) target = $region49
    $region48: #{tpu_custom_call.1} parent=1 // pred_region
      %s405 = ssub.s32 512, 512
      %406 = vsyncadd [#allocation5], %s405
      %s407 = sshll.u32 [#allocation9], 4
      %s408 = int_to_ptr.vmem [resolvable:$true] %s407
      %413 = dma.vmem_to_hbm [thread:$0]  %s408, 512, %s7, [#allocation5], 256, 256, 16
    $region49: #{tpu_custom_call.1} parent=1 // pred_fallthru
      _
    // Predicated region
    $region50: #{tpu_custom_call.1} parent=1 // pred_check
      _
    $region51: #{tpu_custom_call.1} parent=1 // pred_check_branch
      %415 = sbr.rel (0) target = $region53
    $region52: #{tpu_custom_call.1} parent=1 // pred_region
      %416 = dma.done [#allocation5], 512
    $region53: #{tpu_custom_call.1} parent=1 // pred_fallthru
      _
    %417 = vsyncpa [#allocation4], 1
    %418 = vsyncpa [#allocation7], 1
    %419 = vsyncpa [#allocation5], 1

// kernel: tpu_custom_call.1
$region0: #{tpu_custom_call.1}
  #allocation0 [shape = 'u32[]', space=smem, size = 0x4, offset = 0x4, fixed_abs, tag = 'smem constant byte address 0x4 - core index']
  #allocation1 [shape = 'u32[144,128]{1,0:T(1,128)}', space=vmem, size = 0x12000, scoped, tag = 'internal scratch']
  #allocation2 [shape = 'bf16[16,128]{1,0:T(16,128)(2,1)}', space=vmem, size = 0x1000, scoped, tag = 'scratch operand']
  %s0 = inlined_call_operand.hbm [shape: bf16[16,128], index: 0, kind: input, shape index: {}]
  %s1 = inlined_call_operand.hbm [shape: bf16[128,128], index: 1, kind: input, shape index: {}]
  %s2 = inlined_call_operand.vmem [shape: f32[1,128], index: 2, kind: input, shape index: {}]
  %s3 = inlined_call_operand.vmem [shape: f32[1,128], index: 3, kind: input, shape index: {}]
  %s4 = inlined_call_operand.vmem [shape: f32[1,128], index: 4, kind: input, shape index: {}]
  %s5 = inlined_call_operand.hbm [shape: bf16[128,256], index: 5, kind: input, shape index: {}]
  %s6 = inlined_call_operand.vmem [shape: f32[1,256], index: 6, kind: input, shape index: {}]
  %s7 = inlined_call_operand.hbm [shape: f32[16,256], index: 7, kind: output, shape index: {}]
  %s8 = sld [smem:[#allocation0]]
  $region54: #{tpu_custom_call.1} parent=0
    _
  %s10 = ssub.s32 1, %s8
  %s11 = scalar_select 0, %s10, %s8
  $region1: #{tpu_custom_call.1} parent=0
    #allocation3 [shape = 'u8[4096]{0}', space=vmem, size = 0x1000, scoped, tag = 'input window, operand 0, single buffered']
    #allocation4 [shape = 's32[1]{0}', space=sflag, size = 0x4, scoped, tag = 'scoped memory for tpu_custom_call.1']
    #allocation5 [shape = 's32[1]{0}', space=sflag, size = 0x4, scoped, tag = 'scoped memory for tpu_custom_call.1']
    #allocation6 [shape = 'u8[32768]{0}', space=vmem, size = 0x8000, scoped, tag = 'input window, operand 1, single buffered']
    #allocation7 [shape = 's32[1]{0}', space=sflag, size = 0x4, scoped, tag = 'scoped memory for tpu_custom_call.1']
    #allocation8 [shape = 'u8[65536]{0}', space=vmem, size = 0x10000, scoped, tag = 'input window, operand 5, single buffered']
    #allocation9 [shape = 'u8[16384]{0}', space=vmem, size = 0x4000, scoped, tag = 'output window, operand 0, single buffered']
    %12 = vsyncpa [#allocation4], 0
    %13 = vsyncpa [#allocation7], 0
    %14 = vsyncpa [#allocation5], 0
    // Predicated region
    $region2: #{tpu_custom_call.1} parent=1 // pred_check
      _
    $region3: #{tpu_custom_call.1} parent=1 // pred_check_branch
      %16 = sbr.rel (0) target = $region5
    $region4: #{tpu_custom_call.1} parent=1 // pred_region
      %s18 = ssub.s32 128, 128
      %19 = vsyncadd [#allocation4], %s18
      %s20 = sshll.u32 [#allocation3], 4
      %s21 = int_to_ptr.vmem [resolvable:$true] %s20
      %26 = dma.hbm_to_vmem [thread:$0]  %s0, 128, %s21, [#allocation4], 64, 64, 4
    $region5: #{tpu_custom_call.1} parent=1 // pred_fallthru
      _
    // Predicated region
    $region6: #{tpu_custom_call.1} parent=1 // pred_check
      _
    $region7: #{tpu_custom_call.1} parent=1 // pred_check_branch
      %28 = sbr.rel (0) target = $region9
    $region8: #{tpu_custom_call.1} parent=1 // pred_region
      %s30 = ssub.s32 1024, 1024
      %31 = vsyncadd [#allocation7], %s30
      %s32 = sshll.u32 [#allocation6], 4
      %s33 = int_to_ptr.vmem [resolvable:$true] %s32
      %38 = dma.hbm_to_vmem [thread:$0]  %s1, 1024, %s33, [#allocation7], 64, 64, 4
    $region9: #{tpu_custom_call.1} parent=1 // pred_fallthru
      _
    // Predicated region
    $region10: #{tpu_custom_call.1} parent=1 // pred_check
      _
    $region11: #{tpu_custom_call.1} parent=1 // pred_check_branch
      %40 = sbr.rel (0) target = $region13
    $region12: #{tpu_custom_call.1} parent=1 // pred_region
      _
    $region13: #{tpu_custom_call.1} parent=1 // pred_fallthru
      _
    // Predicated region
    $region14: #{tpu_custom_call.1} parent=1 // pred_check
      _
    $region15: #{tpu_custom_call.1} parent=1 // pred_check_branch
      %42 = sbr.rel (0) target = $region17
    $region16: #{tpu_custom_call.1} parent=1 // pred_region
      _
    $region17: #{tpu_custom_call.1} parent=1 // pred_fallthru
      _
    // Predicated region
    $region18: #{tpu_custom_call.1} parent=1 // pred_check
      _
    $region19: #{tpu_custom_call.1} parent=1 // pred_check_branch
      %44 = sbr.rel (0) target = $region21
    $region20: #{tpu_custom_call.1} parent=1 // pred_region
      _
    $region21: #{tpu_custom_call.1} parent=1 // pred_fallthru
      _
    // Predicated region
    $region22: #{tpu_custom_call.1} parent=1 // pred_check
      _
    $region23: #{tpu_custom_call.1} parent=1 // pred_check_branch
      %46 = sbr.rel (0) target = $region25
    $region24: #{tpu_custom_call.1} parent=1 // pred_region
      %s48 = ssub.s32 2048, 2048
      %49 = vsyncadd [#allocation7], %s48
      %s50 = sshll.u32 [#allocation8], 4
      %s51 = int_to_ptr.vmem [resolvable:$true] %s50
      %56 = dma.hbm_to_vmem [thread:$0]  %s5, 2048, %s51, [#allocation7], 128, 128, 8
    $region25: #{tpu_custom_call.1} parent=1 // pred_fallthru
      _
    // Predicated region
    $region26: #{tpu_custom_call.1} parent=1 // pred_check
      _
    $region27: #{tpu_custom_call.1} parent=1 // pred_check_branch
      %58 = sbr.rel (0) target = $region29
    $region28: #{tpu_custom_call.1} parent=1 // pred_region
      _
    $region29: #{tpu_custom_call.1} parent=1 // pred_fallthru
      _
    // Predicated region
    $region30: #{tpu_custom_call.1} parent=1 // pred_check
      _
    $region31: #{tpu_custom_call.1} parent=1 // pred_check_branch
      %60 = sbr.rel (0) target = $region33
    $region32: #{tpu_custom_call.1} parent=1 // pred_region
      %61 = dma.done [#allocation4], 128
    $region33: #{tpu_custom_call.1} parent=1 // pred_fallthru
      _
    // Predicated region
    $region34: #{tpu_custom_call.1} parent=1 // pred_check
      _
    $region35: #{tpu_custom_call.1} parent=1 // pred_check_branch
      %63 = sbr.rel (0) target = $region37
    $region36: #{tpu_custom_call.1} parent=1 // pred_region
      %64 = dma.done [#allocation7], 1024
    $region37: #{tpu_custom_call.1} parent=1 // pred_fallthru
      _
    // Predicated region
    $region38: #{tpu_custom_call.1} parent=1 // pred_check
      _
    $region39: #{tpu_custom_call.1} parent=1 // pred_check_branch
      %66 = sbr.rel (0) target = $region41
    $region40: #{tpu_custom_call.1} parent=1 // pred_region
      %67 = dma.done [#allocation7], 2048
    $region41: #{tpu_custom_call.1} parent=1 // pred_fallthru
      _
    %p69 = scmp.eq.s32.totalorder 0, 0
    // Predicated region
    $region42: #{tpu_custom_call.1} parent=1 // pred_check
      %p70 = pneg %p69
    $region43: #{tpu_custom_call.1} parent=1 // pred_check_branch
      %72 = sbr.rel (%p70) target = $region45
    $region44: #{tpu_custom_call.1} parent=1 // pred_region
      %v73 = vld [vmem:[#allocation3] sm:$0xf]
      %v74 = vld [vmem:[#allocation3 + $0x4] sm:$0xf]
      %v75 = vld [vmem:[#allocation6] sm:$0xf]
      %v76 = vld [vmem:[#allocation6 + $0x4] sm:$0xf]
      %v77 = vld [vmem:[#allocation6 + $0x8] sm:$0xf]
      %v78 = vld [vmem:[#allocation6 + $0xc] sm:$0xf]
      %v79 = vld [vmem:[#allocation6 + $0x10] sm:$0xf]
      %v80 = vld [vmem:[#allocation6 + $0x14] sm:$0xf]
      %v81 = vld [vmem:[#allocation6 + $0x18] sm:$0xf]
      %v82 = vld [vmem:[#allocation6 + $0x1c] sm:$0xf]
      %v83 = vld [vmem:[#allocation6 + $0x20] sm:$0xf]
      %v84 = vld [vmem:[#allocation6 + $0x24] sm:$0xf]
      %v85 = vld [vmem:[#allocation6 + $0x28] sm:$0xf]
      %v86 = vld [vmem:[#allocation6 + $0x2c] sm:$0xf]
      %v87 = vld [vmem:[#allocation6 + $0x30] sm:$0xf]
      %v88 = vld [vmem:[#allocation6 + $0x34] sm:$0xf]
      %v89 = vld [vmem:[#allocation6 + $0x38] sm:$0xf]
      %v90 = vld [vmem:[#allocation6 + $0x3c] sm:$0xf]
      %v91 = vld [vmem:[%s2] sm:$0x1]
      %v93 = vlaneseq
      %v94 = vshrl.u32 %v93, 7
      %v95 = vsub.s32 0, %v94
      %v96 = vrot.slane %v91, %v95
      %v100 = vunpack.c.l.b16 %v73
      %v101 = vunpack.c.l.b16 %v74
      %v102 = vpack.c.b16 %v101, %v100
      %v120 = vunpack.c.l.b16 %v75
      %v121 = vunpack.c.l.b16 %v76
      %v122 = vunpack.c.l.b16 %v77
      %v123 = vunpack.c.l.b16 %v78
      %v124 = vunpack.c.l.b16 %v79
      %v125 = vunpack.c.l.b16 %v80
      %v126 = vunpack.c.l.b16 %v81
      %v127 = vunpack.c.l.b16 %v82
      %v128 = vunpack.c.l.b16 %v83
      %v129 = vunpack.c.l.b16 %v84
      %v130 = vunpack.c.l.b16 %v85
      %v131 = vunpack.c.l.b16 %v86
      %v132 = vunpack.c.l.b16 %v87
      %v133 = vunpack.c.l.b16 %v88
      %v134 = vunpack.c.l.b16 %v89
      %v135 = vunpack.c.l.b16 %v90
      %v136 = vpack.c.b16 %v121, %v120
      %v137 = vpack.c.b16 %v123, %v122
      %v138 = vpack.c.b16 %v125, %v124
      %v139 = vpack.c.b16 %v127, %v126
      %v140 = vpack.c.b16 %v129, %v128
      %v141 = vpack.c.b16 %v131, %v130
      %v142 = vpack.c.b16 %v133, %v132
      %v143 = vpack.c.b16 %v135, %v134
      %152 = vmatprep.subr.bf16.mxu0 0
      %153 = vmatpush1.bf16.msra.mxu0 %v136
      %154 = vmatprep.subr.bf16.mxu0 0
      %155 = vmatpush1.bf16.msra.mxu0 %v137
      %156 = vmatprep.subr.bf16.mxu0 0
      %157 = vmatpush1.bf16.msra.mxu0 %v138
      %158 = vmatprep.subr.bf16.mxu0 0
      %159 = vmatpush1.bf16.msra.mxu0 %v139
      %160 = vmatprep.subr.bf16.mxu0 0
      %161 = vmatpush1.bf16.msra.mxu0 %v140
      %162 = vmatprep.subr.bf16.mxu0 0
      %163 = vmatpush1.bf16.msra.mxu0 %v141
      %164 = vmatprep.subr.bf16.mxu0 0
      %165 = vmatpush1.bf16.msra.mxu0 %v142
      %166 = vmatprep.subr.bf16.mxu0 0
      %167 = vmatpush1.bf16.msra.mxu0 %v143
      %168 = vmatprep.subr.bf16.mxu0 0
      %169 = vmatpush1.bf16.msra.mxu0 0
      %170 = vmatprep.subr.bf16.mxu0 0
      %171 = vmatpush1.bf16.msra.mxu0 0
      %172 = vmatprep.subr.bf16.mxu0 0
      %173 = vmatpush1.bf16.msra.mxu0 0
      %174 = vmatprep.subr.bf16.mxu0 0
      %175 = vmatpush1.bf16.msra.mxu0 0
      %176 = vmatprep.subr.bf16.mxu0 0
      %177 = vmatpush1.bf16.msra.mxu0 0
      %178 = vmatprep.subr.bf16.mxu0 0
      %179 = vmatpush1.bf16.msra.mxu0 0
      %180 = vmatprep.subr.bf16.mxu0 0
      %181 = vmatpush1.bf16.msra.mxu0 0
      %182 = vmatprep.subr.bf16.mxu0 0
      %183 = vmatpush1.bf16.msra.mxu0 0
      %184 = vmatprep.mubr.bf16.mxu0 0
      %185 = vmatmul.mubr.bf16.gmra.mrb[0].mxu0 %v102
      %v186 = vpop.f32.mrb[0].mxu0
      %v187 = vadd.f32 %v96, %v186
      %v188 = vpop.f32.mrb[0].mxu0
      %v189 = vpop.f32.mrb[0].mxu0
      %v190 = vadd.f32 %v96, %v189
      %v191 = vpop.f32.mrb[0].mxu0
      %192 = vdwg.mxu0
      %v193 = vmul.f32 %v187, 0.5
      %v194 = vmul.f32 %v190, 0.5
      %v195 = vmul.f32 %v187, 0.70710677
      %v196 = vmul.f32 %v190, 0.70710677
      %v197 = verf.f32.pop %v195
      %v198 = verf.f32.pop %v196
      %v199 = vadd.f32 %v197, 1.0
      %v200 = vadd.f32 %v198, 1.0
      %v201 = vmul.f32 %v193, %v199
      %v202 = vmul.f32 %v194, %v200
      %203 = vadd.xlane.f32.xlu0 %v201
      %v204 = vpop.xlane.xlu0 %203
      %205 = vadd.xlane.f32.xlu0 %v202
      %v206 = vpop.xlane.xlu0 %205
      %v207 = vrcp.pop 128.0
      %v208 = vmul.f32 %v204, %v207
      %v209 = vmul.f32 %v206, %v207
      %v210 = vsub.f32 %v201, %v208
      %v211 = vsub.f32 %v202, %v209
      %v212 = vmul.f32 %v210, %v210
      %v213 = vmul.f32 %v211, %v211
      %214 = vadd.xlane.f32.xlu0 %v212
      %v215 = vpop.xlane.xlu0 %214
      %216 = vadd.xlane.f32.xlu0 %v213
      %v217 = vpop.xlane.xlu0 %216
      %v218 = vmul.f32 %v215, %v207
      %v219 = vmul.f32 %v217, %v207
      %v220 = vadd.f32 %v218, 1e-05
      %v221 = vadd.f32 %v219, 1e-05
      %v222 = vrsqrt.pop %v220
      %v223 = vrsqrt.pop %v221
      %v224 = vmul.f32 %v210, %v222
      %v225 = vmul.f32 %v211, %v223
      %v226 = vld [vmem:[%s3] sm:$0x1]
      %v228 = vlaneseq
      %v229 = vshrl.u32 %v228, 7
      %v230 = vsub.s32 0, %v229
      %v231 = vrot.slane %v226, %v230
      %v233 = vmul.f32 %v224, %v231
      %v234 = vmul.f32 %v225, %v231
      %v235 = vld [vmem:[%s4] sm:$0x1]
      %v237 = vlaneseq
      %v238 = vshrl.u32 %v237, 7
      %v239 = vsub.s32 0, %v238
      %v240 = vrot.slane %v235, %v239
      %v242 = vadd.f32 %v233, %v240
      %v243 = vadd.f32 %v234, %v240
      %v244 = vpack.c.bf16 %v243, %v242
      %245 = vst [vmem:[#allocation2] sm:$0xff] %v244
    $region45: #{tpu_custom_call.1} parent=1 // pred_fallthru
      _
    %v246 = vld [vmem:[#allocation2] sm:$0xff]
    %v247 = vld [vmem:[#allocation8] sm:$0xff]
    %v248 = vld [vmem:[#allocation8 + $0x8] sm:$0xff]
    %v249 = vld [vmem:[#allocation8 + $0x10] sm:$0xff]
    %v250 = vld [vmem:[#allocation8 + $0x18] sm:$0xff]
    %v251 = vld [vmem:[#allocation8 + $0x20] sm:$0xff]
    %v252 = vld [vmem:[#allocation8 + $0x28] sm:$0xff]
    %v253 = vld [vmem:[#allocation8 + $0x30] sm:$0xff]
    %v254 = vld [vmem:[#allocation8 + $0x38] sm:$0xff]
    %v255 = vld [vmem:[#allocation8 + $0x40] sm:$0xff]
    %v256 = vld [vmem:[#allocation8 + $0x48] sm:$0xff]
    %v257 = vld [vmem:[#allocation8 + $0x50] sm:$0xff]
    %v258 = vld [vmem:[#allocation8 + $0x58] sm:$0xff]
    %v259 = vld [vmem:[#allocation8 + $0x60] sm:$0xff]
    %v260 = vld [vmem:[#allocation8 + $0x68] sm:$0xff]
    %v261 = vld [vmem:[#allocation8 + $0x70] sm:$0xff]
    %v262 = vld [vmem:[#allocation8 + $0x78] sm:$0xff]
    %v263 = vld [vmem:[%s6] sm:$0x3]
    %v265 = vlaneseq
    %v266 = vshrl.u32 %v265, 7
    %v267 = vsub.s32 0, %v266
    %v268 = vrot.slane %v263, %v267
    %v269 = vlaneseq
    %v270 = vshrl.u32 %v269, 7
    %v271 = vsub.s32 1, %v270
    %v272 = vrot.slane %v263, %v271
    %v291 = vunpack.c.l.b16 %v247
    %v292 = vunpack.c.h.b16 %v247
    %v293 = vunpack.c.l.b16 %v248
    %v294 = vunpack.c.h.b16 %v248
    %v295 = vunpack.c.l.b16 %v249
    %v296 = vunpack.c.h.b16 %v249
    %v297 = vunpack.c.l.b16 %v250
    %v298 = vunpack.c.h.b16 %v250
    %v299 = vunpack.c.l.b16 %v251
    %v300 = vunpack.c.h.b16 %v251
    %v301 = vunpack.c.l.b16 %v252
    %v302 = vunpack.c.h.b16 %v252
    %v303 = vunpack.c.l.b16 %v253
    %v304 = vunpack.c.h.b16 %v253
    %v305 = vunpack.c.l.b16 %v254
    %v306 = vunpack.c.h.b16 %v254
    %v307 = vunpack.c.l.b16 %v255
    %v308 = vunpack.c.h.b16 %v255
    %v309 = vunpack.c.l.b16 %v256
    %v310 = vunpack.c.h.b16 %v256
    %v311 = vunpack.c.l.b16 %v257
    %v312 = vunpack.c.h.b16 %v257
    %v313 = vunpack.c.l.b16 %v258
    %v314 = vunpack.c.h.b16 %v258
    %v315 = vunpack.c.l.b16 %v259
    %v316 = vunpack.c.h.b16 %v259
    %v317 = vunpack.c.l.b16 %v260
    %v318 = vunpack.c.h.b16 %v260
    %v319 = vunpack.c.l.b16 %v261
    %v320 = vunpack.c.h.b16 %v261
    %v321 = vunpack.c.l.b16 %v262
    %v322 = vunpack.c.h.b16 %v262
    %v323 = vpack.c.b16 %v293, %v291
    %v324 = vpack.c.b16 %v294, %v292
    %v325 = vpack.c.b16 %v297, %v295
    %v326 = vpack.c.b16 %v298, %v296
    %v327 = vpack.c.b16 %v301, %v299
    %v328 = vpack.c.b16 %v302, %v300
    %v329 = vpack.c.b16 %v305, %v303
    %v330 = vpack.c.b16 %v306, %v304
    %v331 = vpack.c.b16 %v309, %v307
    %v332 = vpack.c.b16 %v310, %v308
    %v333 = vpack.c.b16 %v313, %v311
    %v334 = vpack.c.b16 %v314, %v312
    %v335 = vpack.c.b16 %v317, %v315
    %v336 = vpack.c.b16 %v318, %v316
    %v337 = vpack.c.b16 %v321, %v319
    %v338 = vpack.c.b16 %v322, %v320
    %355 = vmatprep.subr.bf16.mxu0 %v324
    %356 = vmatpush1.bf16.msra.mxu0 %v323
    %357 = vmatprep.subr.bf16.mxu0 %v326
    %358 = vmatpush1.bf16.msra.mxu0 %v325
    %359 = vmatprep.subr.bf16.mxu0 %v328
    %360 = vmatpush1.bf16.msra.mxu0 %v327
    %361 = vmatprep.subr.bf16.mxu0 %v330
    %362 = vmatpush1.bf16.msra.mxu0 %v329
    %363 = vmatprep.subr.bf16.mxu0 %v332
    %364 = vmatpush1.bf16.msra.mxu0 %v331
    %365 = vmatprep.subr.bf16.mxu0 %v334
    %366 = vmatpush1.bf16.msra.mxu0 %v333
    %367 = vmatprep.subr.bf16.mxu0 %v336
    %368 = vmatpush1.bf16.msra.mxu0 %v335
    %369 = vmatprep.subr.bf16.mxu0 %v338
    %370 = vmatpush1.bf16.msra.mxu0 %v337
    %371 = vmatprep.subr.bf16.mxu0 0
    %372 = vmatpush1.bf16.msra.mxu0 0
    %373 = vmatprep.subr.bf16.mxu0 0
    %374 = vmatpush1.bf16.msra.mxu0 0
    %375 = vmatprep.subr.bf16.mxu0 0
    %376 = vmatpush1.bf16.msra.mxu0 0
    %377 = vmatprep.subr.bf16.mxu0 0
    %378 = vmatpush1.bf16.msra.mxu0 0
    %379 = vmatprep.subr.bf16.mxu0 0
    %380 = vmatpush1.bf16.msra.mxu0 0
    %381 = vmatprep.subr.bf16.mxu0 0
    %382 = vmatpush1.bf16.msra.mxu0 0
    %383 = vmatprep.subr.bf16.mxu0 0
    %384 = vmatpush1.bf16.msra.mxu0 0
    %385 = vmatprep.subr.bf16.mxu0 0
    %386 = vmatpush1.bf16.msra.mxu0 0
    %387 = vmatprep.mubr.bf16.mxu0 0
    %388 = vmatmul.mubr.bf16.gmra.mrb[0].mxu0 %v246
    %v389 = vpop.f32.mrb[0].mxu0
    %v390 = vadd.f32 %v268, %v389
    %v391 = vpop.f32.mrb[0].mxu0
    %v392 = vadd.f32 %v272, %v391
    %v393 = vpop.f32.mrb[0].mxu0
    %v394 = vadd.f32 %v268, %v393
    %v395 = vpop.f32.mrb[0].mxu0
    %v396 = vadd.f32 %v272, %v395
    %397 = vdwg.mxu0
    %398 = vst [vmem:[#allocation9] sm:$0xff] %v390
    %399 = vst [vmem:[#allocation9 + $0x8] sm:$0xff] %v392
    %400 = vst [vmem:[#allocation9 + $0x10] sm:$0xff] %v394
    %401 = vst [vmem:[#allocation9 + $0x18] sm:$0xff] %v396
    // Predicated region
    $region46: #{tpu_custom_call.1} parent=1 // pred_check
      _
    $region47: #{tpu_custom_call.1} parent=1 // pred_check_branch
      %403 = sbr.rel (0) target = $region49
    $region48: #{tpu_custom_call.1} parent=1 // pred_region
      %s405 = ssub.s32 512, 512
      %406 = vsyncadd [#allocation5], %s405
      %s407 = sshll.u32 [#allocation9], 4
      %s408 = int_to_ptr.vmem [resolvable:$true] %s407
      %413 = dma.vmem_to_hbm [thread:$0]  %s408, 512, %s7, [#allocation5], 256, 256, 16
    $region49: #{tpu_custom_call.1} parent=1 // pred_fallthru
      _
    // Predicated region
    $region50: #{tpu_custom_call.1} parent=1 // pred_check
      _
    $region51: #{tpu_custom_call.1} parent=1 // pred_check_branch
      %415 = sbr.rel (0) target = $region53
    $region52: #{tpu_custom_call.1} parent=1 // pred_region
      %416 = dma.done [#allocation5], 512
    $region53: #{tpu_custom_call.1} parent=1 // pred_fallthru
      _
    %417 = vsyncpa [#allocation4], 1
    %418 = vsyncpa [#allocation7], 1
    %419 = vsyncpa [#allocation5], 1

</llo_original>
